<compile_context>
chip_gen: v7x
topology: tpu7x:2x2x1
jax: 0.10.0
libtpu: 0.0.40
codegen_flags: <defaults>
</compile_context>

<pallas_src>
import jax
import jax.numpy as jnp
from jax.experimental import pallas as pl
from jax.experimental.pallas import tpu as pltpu


def _round_up(x, m):
    return (x + m - 1) // m * m


# --------------------------------------------------------------------------- #
# Pallas kernel: per grid block, reduce sum(aff * w) into a lane-dense tile.
# --------------------------------------------------------------------------- #
def _weighted_sum_kernel(aff_ref, w_ref, out_ref):
    aff = aff_ref[...]                            # (BLOCK_ROWS, 128) f32
    w = w_ref[...].astype(jnp.float32)            # (BLOCK_ROWS, 128) bf16 -> f32
    s = jnp.sum(aff * w)                          # single reduction per block
    # Lane-dense, unmasked (8,128) store of the block partial sum.
    out_ref[...] = jnp.full(out_ref.shape, s, dtype=jnp.float32)


def _weighted_sum_call(n_blocks, block_rows):
    return pl.pallas_call(
        _weighted_sum_kernel,
        out_shape=jax.ShapeDtypeStruct((n_blocks, 8, 128), jnp.float32),
        grid_spec=pltpu.PrefetchScalarGridSpec(
            num_scalar_prefetch=0,
            grid=(n_blocks,),
            in_specs=[
                pl.BlockSpec((block_rows, 128), lambda i: (i, 0)),   # aff (f32)
                pl.BlockSpec((block_rows, 128), lambda i: (i, 0)),   # w   (bf16)
            ],
            out_specs=pl.BlockSpec((1, 8, 128), lambda i: (i, 0, 0)),
        ),
        compiler_params=pltpu.CompilerParams(
            # Blocks are independent partial sums -> parallel axis; on v7x this
            # shards the DMA+VPU stream across both TensorCores.
            dimension_semantics=("parallel",),
            vmem_limit_bytes=32 * 1024 * 1024,
        ),
    )


# --------------------------------------------------------------------------- #
# Wrapper: build the compact per-edge weight, lane-dense slabs, one fused call.
# --------------------------------------------------------------------------- #
def _level_edge_weight(pixel_mask, e_d, si):
    """w = cut - join for one edge distance, padded + stride-sampled.

    Exact reference semantics: cut = |a - b|, join = (a + b == 2).  Zero
    padding contributes exactly 0 (|0-0| = 0, 0+0 != 2).
    """
    pb = int(e_d / 2.0)
    pa = int(e_d / 2.0)
    row_pad = (0, 1) if e_d == 1 else (pb, pa)
    col_pad = (0, 1) if e_d == 1 else (pb, pa)

    a_row = pixel_mask[e_d:, :]
    b_row = pixel_mask[:-e_d, :]
    w_row = jnp.abs(a_row - b_row) - ((a_row + b_row) == 2.0).astype(jnp.float32)
    w_row = jnp.pad(w_row, (row_pad, (0, 0)))

    a_col = pixel_mask[:, e_d:]
    b_col = pixel_mask[:, :-e_d]
    w_col = jnp.abs(a_col - b_col) - ((a_col + b_col) == 2.0).astype(jnp.float32)
    w_col = jnp.pad(w_col, ((0, 0), col_pad))

    return jnp.stack([w_row, w_col], axis=0)[:, ::si, ::si]


def mask_score(pixel_mask_orig_size, affinity_logits, batch_index,
               edge_distances, edge_sampling_intervals, logits_multiplier=1.0,
               max_block_rows=1024):
    """JAX/Pallas equivalent of MaskScore.forward."""
    pixel_mask = pixel_mask_orig_size[2::4, 2::4].astype(jnp.float32)

    level_aff, level_w, level_scale, level_nelems = [], [], [], []
    for i, e_d in enumerate(edge_distances):
        si = 1 if edge_sampling_intervals is None else int(edge_sampling_intervals[i])
        w = _level_edge_weight(pixel_mask, int(e_d), si)
        aff = affinity_logits[i][batch_index].astype(jnp.float32)   # (2, Hs, Ws)
        if aff.shape != w.shape:
            raise ValueError(f"level {i}: affinity shape {aff.shape} "
                             f"!= edge shape {w.shape}")
        level_aff.append(aff)
        level_w.append(w)
        # mean() in the reference divides by the full (2, Hs, Ws) element count.
        level_scale.append(float(logits_multiplier) / float(w.size))
        level_nelems.append(int(w.size))

    # One uniform block size: rows of 128 lanes, sublane count a multiple of 16
    # (bf16 packing), capped at max_block_rows (sweep 512-2048 for prod sizes).
    max_rows = max(_round_up(n, 128) // 128 for n in level_nelems)
    block_rows = _round_up(min(max_block_rows, _round_up(max_rows, 16)), 16)
    block_elems = block_rows * 128

    aff_slabs, w_slabs, block_scales = [], [], []
    for aff, w, scale, n in zip(level_aff, level_w, level_scale, level_nelems):
        n_pad = _round_up(n, block_elems)
        aff_flat = jnp.pad(aff.reshape(-1), (0, n_pad - n))
        w_flat = jnp.pad(w.reshape(-1), (0, n_pad - n))
        aff_slabs.append(aff_flat.reshape(-1, 128))
        # bf16 is exact for {-1, 0, 1} (binary masks); non-binary masks would
        # round at ~3 decimal digits here.
        w_slabs.append(w_flat.reshape(-1, 128).astype(jnp.bfloat16))
        block_scales.extend([scale] * (n_pad // block_elems))

    aff_all = jnp.concatenate(aff_slabs, axis=0)     # (n_blocks*block_rows, 128)
    w_all = jnp.concatenate(w_slabs, axis=0)
    n_blocks = aff_all.shape[0] // block_rows

    partials = _weighted_sum_call(n_blocks, block_rows)(aff_all, w_all)[:, 0, 0]
    scales = jnp.asarray(block_scales, dtype=jnp.float32)
    # scale applied to reduced scalars only; result == -(join_logits - cut_logits)
    return jnp.sum(partials * scales)


# --------------------------------------------------------------------------- #
# Pure-JAX reference (mirrors the PyTorch module) for a correctness check.
# --------------------------------------------------------------------------- #
def mask_score_ref(pixel_mask_orig_size, affinity_logits, batch_index,
                   edge_distances, edge_sampling_intervals,
                   logits_multiplier=1.0):
    pixel_mask = pixel_mask_orig_size[2::4, 2::4].astype(jnp.float32)
    cut_logits = jnp.float32(0.0)
    join_logits = jnp.float32(0.0)
    for i, e_d in enumerate(edge_distances):
        si = 1 if edge_sampling_intervals is None else edge_sampling_intervals[i]
        pb = int(e_d / 2.0)
        pa = int(e_d / 2.0)
        row_pad = (0, 1) if e_d == 1 else (pb, pa)
        col_pad = (0, 1) if e_d == 1 else (pb, pa)

        cut_row = jnp.pad(jnp.abs(pixel_mask[e_d:, :] - pixel_mask[:-e_d, :]),
                          (row_pad, (0, 0)))
        join_row = jnp.pad(((pixel_mask[e_d:, :] + pixel_mask[:-e_d, :]) == 2
                            ).astype(jnp.float32), (row_pad, (0, 0)))
        cut_col = jnp.pad(jnp.abs(pixel_mask[:, e_d:] - pixel_mask[:, :-e_d]),
                          ((0, 0), col_pad))
        join_col = jnp.pad(((pixel_mask[:, e_d:] + pixel_mask[:, :-e_d]) == 2
                            ).astype(jnp.float32), ((0, 0), col_pad))

        cut = jnp.stack([cut_row, cut_col], 0)[:, ::si, ::si]
        join = jnp.stack([join_row, join_col], 0)[:, ::si, ::si]
        aff = affinity_logits[i][batch_index].astype(jnp.float32)

        cut_logits = cut_logits + (logits_multiplier * aff * cut).mean()
        join_logits = join_logits + (logits_multiplier * aff * join).mean()
    return -1.0 * (join_logits - cut_logits)


if __name__ == "__main__":
    key = jax.random.PRNGKey(0)
    k_mask, k_aff0, k_aff1 = jax.random.split(key, 3)

    # Original-size binary mask: (64, 64) -> pixel_mask[2::4, 2::4] = (16, 16).
    H_orig = W_orig = 64
    pixel_mask_orig = (jax.random.uniform(k_mask, (H_orig, W_orig)) > 0.5
                       ).astype(jnp.float32)

    edge_distances = [1, 2]
    edge_sampling_intervals = [1, 2]
    batch_index = 0
    B = 2

    # affinity_logits[i]: (B, 2, H_i, W_i) with H_i = W_i = 16 // si.
    affinity_logits = [
        jax.random.normal(k_aff0, (B, 2, 16, 16), dtype=jnp.float32),
        jax.random.normal(k_aff1, (B, 2, 8, 8), dtype=jnp.float32),
    ]

    @jax.jit
    def run(pm, aff0, aff1):
        return mask_score(pm, [aff0, aff1], batch_index,
                          edge_distances, edge_sampling_intervals,
                          logits_multiplier=1.0)

    result = run(pixel_mask_orig, affinity_logits[0], affinity_logits[1])
    jax.block_until_ready(result)

    reference = mask_score_ref(pixel_mask_orig, affinity_logits, batch_index,
                               edge_distances, edge_sampling_intervals,
                               logits_multiplier=1.0)
    jax.block_until_ready(reference)

    assert jnp.allclose(result, reference, rtol=1e-5, atol=1e-5), (
        f"mismatch: pallas={float(result)} ref={float(reference)}")

    print("KERNEL_OK")
</pallas_src>

<mosaic_0001>
module attributes {stable_mosaic.version = 11 : i64} {
  func.func @_weighted_sum_kernel(%arg0: i32, %arg1: memref<16x128xf32, #tpu.memory_space<vmem>>, %arg2: memref<16x128xbf16, #tpu.memory_space<vmem>>, %arg3: memref<1x8x128xf32, #tpu.memory_space<vmem>>) attributes {dimension_semantics = [#tpu.dimension_semantics<parallel>], iteration_bounds = array<i64: 2>, scalar_prefetch = 0 : i64, scratch_operands = 0 : i64, tpu.core_type = #tpu.core_type<tc>, window_params = [{transform_indices = @transform_0, window_bounds = array<i64: 16, 128>}, {transform_indices = @transform_1, window_bounds = array<i64: 16, 128>}, {transform_indices = @transform_2, window_bounds = array<i64: 1, 8, 128>}]} {
    %c0 = arith.constant 0 : index
    %c0_0 = arith.constant 0 : index
    %0 = vector.load %arg1[%c0, %c0_0] : memref<16x128xf32, #tpu.memory_space<vmem>>, vector<16x128xf32>
    %c0_1 = arith.constant 0 : index
    %c0_2 = arith.constant 0 : index
    %1 = vector.load %arg2[%c0_1, %c0_2] : memref<16x128xbf16, #tpu.memory_space<vmem>>, vector<16x128xbf16>
    %2 = arith.extf %1 : vector<16x128xbf16> to vector<16x128xf32>
    %3 = arith.mulf %0, %2 : vector<16x128xf32>
    %4 = vector.shape_cast %3 : vector<16x128xf32> to vector<1x16x128xf32>
    %cst = arith.constant dense<0.000000e+00> : vector<1xf32>
    %5 = vector.multi_reduction <add>, %4, %cst [1, 2] : vector<1x16x128xf32> to vector<1xf32>
    %6 = vector.shape_cast %5 : vector<1xf32> to vector<1x1x1xf32>
    %7 = vector.extract %6[0, 0, 0] : f32 from vector<1x1x1xf32>
    %8 = vector.broadcast %7 : f32 to vector<1x8x128xf32>
    %c0_3 = arith.constant 0 : index
    %c0_4 = arith.constant 0 : index
    %c0_5 = arith.constant 0 : index
    %9 = vector.load %arg3[%c0_3, %c0_4, %c0_5] : memref<1x8x128xf32, #tpu.memory_space<vmem>>, vector<1x8x128xf32>
    tpu.vector_store %arg3[%c0_3, %c0_4, %c0_5], %8 {strides = array<i32>} : memref<1x8x128xf32, #tpu.memory_space<vmem>>, vector<1x8x128xf32>,
    return
  }
  func.func @transform_0(%arg0: i32) -> (i32, i32) {
    %c0_i32 = arith.constant 0 : i32
    %c0_i32_0 = arith.constant 0 : i32
    return %arg0, %c0_i32 : i32, i32
  }
  func.func @transform_1(%arg0: i32) -> (i32, i32) {
    %c0_i32 = arith.constant 0 : i32
    %c0_i32_0 = arith.constant 0 : i32
    return %arg0, %c0_i32 : i32, i32
  }
  func.func @transform_2(%arg0: i32) -> (i32, i32, i32) {
    %c0_i32 = arith.constant 0 : i32
    %c0_i32_0 = arith.constant 0 : i32
    %c0_i32_1 = arith.constant 0 : i32
    return %arg0, %c0_i32, %c0_i32_0 : i32, i32, i32
  }
}

</mosaic_0001>

<llo_original>
// kernel: squeeze.4
$region0: #{squeeze.4}
  %s0 = inlined_call_operand.vmem [shape: f32[1,2,8,8], index: 0, kind: input, shape index: {}]
  %s1 = inlined_call_operand.vmem [shape: f32[128], index: 1, kind: output, shape index: {}]
  $region1: #{squeeze.4} parent=0
    #allocation0 [shape = 'u8[4096]{0}', space=vmem, size = 0x1000, scoped, tag = 'scoped mem for output reshape']
    %v2 = vld [vmem:[%s0] sm:$0x1]
    %vm3 = vcmask 64512
    %4 = vst.msk [vmem:[#allocation0] sm:$0x1] %vm3, %v2
    %s5 = scalar_lea.vmem %s0, 15
    %v6 = vld [vmem:[%s5] sm:$0x1]
    %7 = vrot.lane.b32.xlu0 %v6, 120
    %v8 = vpop.permute.xlu0 %7
    %vm9 = vcmask 1048512
    %10 = vst.msk [vmem:[#allocation0] sm:$0x1] %vm9, %v8
    %s11 = scalar_lea.vmem %s0, 14
    %v12 = vld [vmem:[%s11] sm:$0x1]
    %13 = vrot.lane.b32.xlu0 %v12, 112
    %v14 = vpop.permute.xlu0 %13
    %vm15 = vcmask 982912
    %16 = vst.msk [vmem:[#allocation0] sm:$0x1] %vm15, %v14
    %s17 = scalar_lea.vmem %s0, 13
    %v18 = vld [vmem:[%s17] sm:$0x1]
    %19 = vrot.lane.b32.xlu0 %v18, 104
    %v20 = vpop.permute.xlu0 %19
    %vm21 = vcmask 917312
    %22 = vst.msk [vmem:[#allocation0] sm:$0x1] %vm21, %v20
    %s23 = scalar_lea.vmem %s0, 12
    %v24 = vld [vmem:[%s23] sm:$0x1]
    %25 = vrot.lane.b32.xlu0 %v24, 96
    %v26 = vpop.permute.xlu0 %25
    %vm27 = vcmask 851712
    %28 = vst.msk [vmem:[#allocation0] sm:$0x1] %vm27, %v26
    %s29 = scalar_lea.vmem %s0, 11
    %v30 = vld [vmem:[%s29] sm:$0x1]
    %31 = vrot.lane.b32.xlu0 %v30, 88
    %v32 = vpop.permute.xlu0 %31
    %vm33 = vcmask 786112
    %34 = vst.msk [vmem:[#allocation0] sm:$0x1] %vm33, %v32
    %s35 = scalar_lea.vmem %s0, 10
    %v36 = vld [vmem:[%s35] sm:$0x1]
    %37 = vrot.lane.b32.xlu0 %v36, 80
    %v38 = vpop.permute.xlu0 %37
    %vm39 = vcmask 720512
    %40 = vst.msk [vmem:[#allocation0] sm:$0x1] %vm39, %v38
    %s41 = scalar_lea.vmem %s0, 9
    %v42 = vld [vmem:[%s41] sm:$0x1]
    %43 = vrot.lane.b32.xlu0 %v42, 72
    %v44 = vpop.permute.xlu0 %43
    %vm45 = vcmask 654912
    %46 = vst.msk [vmem:[#allocation0] sm:$0x1] %vm45, %v44
    %s47 = scalar_lea.vmem %s0, 8
    %v48 = vld [vmem:[%s47] sm:$0x1]
    %49 = vrot.lane.b32.xlu0 %v48, 64
    %v50 = vpop.permute.xlu0 %49
    %vm51 = vcmask 589312
    %52 = vst.msk [vmem:[#allocation0] sm:$0x1] %vm51, %v50
    %s53 = scalar_lea.vmem %s0, 7
    %v54 = vld [vmem:[%s53] sm:$0x1]
    %55 = vrot.lane.b32.xlu0 %v54, 56
    %v56 = vpop.permute.xlu0 %55
    %vm57 = vcmask 523712
    %58 = vst.msk [vmem:[#allocation0] sm:$0x1] %vm57, %v56
    %s59 = scalar_lea.vmem %s0, 6
    %v60 = vld [vmem:[%s59] sm:$0x1]
    %61 = vrot.lane.b32.xlu0 %v60, 48
    %v62 = vpop.permute.xlu0 %61
    %vm63 = vcmask 458112
    %64 = vst.msk [vmem:[#allocation0] sm:$0x1] %vm63, %v62
    %s65 = scalar_lea.vmem %s0, 5
    %v66 = vld [vmem:[%s65] sm:$0x1]
    %67 = vrot.lane.b32.xlu0 %v66, 40
    %v68 = vpop.permute.xlu0 %67
    %vm69 = vcmask 392512
    %70 = vst.msk [vmem:[#allocation0] sm:$0x1] %vm69, %v68
    %s71 = scalar_lea.vmem %s0, 4
    %v72 = vld [vmem:[%s71] sm:$0x1]
    %73 = vrot.lane.b32.xlu0 %v72, 32
    %v74 = vpop.permute.xlu0 %73
    %vm75 = vcmask 326912
    %76 = vst.msk [vmem:[#allocation0] sm:$0x1] %vm75, %v74
    %s77 = scalar_lea.vmem %s0, 3
    %v78 = vld [vmem:[%s77] sm:$0x1]
    %79 = vrot.lane.b32.xlu0 %v78, 24
    %v80 = vpop.permute.xlu0 %79
    %vm81 = vcmask 261312
    %82 = vst.msk [vmem:[#allocation0] sm:$0x1] %vm81, %v80
    %s83 = scalar_lea.vmem %s0, 2
    %v84 = vld [vmem:[%s83] sm:$0x1]
    %85 = vrot.lane.b32.xlu0 %v84, 16
    %v86 = vpop.permute.xlu0 %85
    %vm87 = vcmask 195712
    %88 = vst.msk [vmem:[#allocation0] sm:$0x1] %vm87, %v86
    %s89 = scalar_lea.vmem %s0, 1
    %v90 = vld [vmem:[%s89] sm:$0x1]
    %91 = vrot.lane.b32.xlu0 %v90, 8
    %v92 = vpop.permute.xlu0 %91
    %vm93 = vcmask 130112
    %94 = vst.msk [vmem:[#allocation0] sm:$0x1] %vm93, %v92
    %s96 = sshllo.u32 0, 1
    %v98 = vld [vmem:[#allocation0] sm:%s96]
    %s99 = sshllo.u32 0, 1
    %100 = vst [vmem:[%s1] sm:%s99] %v98

// kernel: squeeze.3
$region0: #{squeeze.3}
  %s0 = inlined_call_operand.vmem [shape: f32[1,2,16,16], index: 0, kind: input, shape index: {}]
  %s1 = inlined_call_operand.vmem [shape: f32[512], index: 1, kind: output, shape index: {}]
  $region1: #{squeeze.3} parent=0
    #allocation0 [shape = 'u8[4096]{0}', space=vmem, size = 0x1000, scoped, tag = 'scoped mem for output reshape']
    %v2 = vld [vmem:[%s0] ss:$8 sm:$0xf]
    %vm3 = vcmask 130048
    %4 = vst.msk [vmem:[#allocation0] sm:$0xf] %vm3, %v2
    %s5 = scalar_lea.vmem %s0, 7
    %v6 = vld [vmem:[%s5] ss:$8 sm:$0xf]
    %7 = vrot.lane.b32.xlu0 %v6, 112
    %v8 = vpop.permute.xlu0 %7
    %vm9 = vcmask 1048448
    %10 = vst.msk [vmem:[#allocation0] sm:$0xf] %vm9, %v8
    %s11 = scalar_lea.vmem %s0, 6
    %v12 = vld [vmem:[%s11] ss:$8 sm:$0xf]
    %13 = vrot.lane.b32.xlu0 %v12, 96
    %v14 = vpop.permute.xlu0 %13
    %vm15 = vcmask 917248
    %16 = vst.msk [vmem:[#allocation0] sm:$0xf] %vm15, %v14
    %s17 = scalar_lea.vmem %s0, 5
    %v18 = vld [vmem:[%s17] ss:$8 sm:$0xf]
    %19 = vrot.lane.b32.xlu0 %v18, 80
    %v20 = vpop.permute.xlu0 %19
    %vm21 = vcmask 786048
    %22 = vst.msk [vmem:[#allocation0] sm:$0xf] %vm21, %v20
    %s23 = scalar_lea.vmem %s0, 4
    %v24 = vld [vmem:[%s23] ss:$8 sm:$0xf]
    %25 = vrot.lane.b32.xlu0 %v24, 64
    %v26 = vpop.permute.xlu0 %25
    %vm27 = vcmask 654848
    %28 = vst.msk [vmem:[#allocation0] sm:$0xf] %vm27, %v26
    %s29 = scalar_lea.vmem %s0, 3
    %v30 = vld [vmem:[%s29] ss:$8 sm:$0xf]
    %31 = vrot.lane.b32.xlu0 %v30, 48
    %v32 = vpop.permute.xlu0 %31
    %vm33 = vcmask 523648
    %34 = vst.msk [vmem:[#allocation0] sm:$0xf] %vm33, %v32
    %s35 = scalar_lea.vmem %s0, 2
    %v36 = vld [vmem:[%s35] ss:$8 sm:$0xf]
    %37 = vrot.lane.b32.xlu0 %v36, 32
    %v38 = vpop.permute.xlu0 %37
    %vm39 = vcmask 392448
    %40 = vst.msk [vmem:[#allocation0] sm:$0xf] %vm39, %v38
    %s41 = scalar_lea.vmem %s0, 1
    %v42 = vld [vmem:[%s41] ss:$8 sm:$0xf]
    %43 = vrot.lane.b32.xlu0 %v42, 16
    %v44 = vpop.permute.xlu0 %43
    %vm45 = vcmask 261248
    %46 = vst.msk [vmem:[#allocation0] sm:$0xf] %vm45, %v44
    %s48 = sshllo.u32 0, 4
    %v50 = vld [vmem:[#allocation0] sm:%s48]
    %s51 = sshllo.u32 0, 4
    %52 = vst [vmem:[%s1] sm:%s51] %v50

// kernel: run.1
$region0: #{run.1}
  #allocation0 [shape = 'u32[]', space=smem, size = 0x4, offset = 0x4, fixed_abs, tag = 'smem constant byte address 0x4 - core index']
  #allocation1 [shape = 'u32[144,128]{1,0:T(1,128)}', space=vmem, size = 0x12000, scoped, tag = 'internal scratch']
  %s0 = inlined_call_operand.vmem [shape: f32[32,128], index: 0, kind: input, shape index: {}]
  %s1 = inlined_call_operand.vmem [shape: bf16[32,128], index: 1, kind: input, shape index: {}]
  %s2 = inlined_call_operand.vmem [shape: f32[2,8,128], index: 2, kind: output, shape index: {}]
  %s3 = sld [smem:[#allocation0]]
  $region41: #{run.1} parent=0
    _
  %s5 = ssub.s32 1, %s3
  %s6 = scalar_select 0, %s5, %s3
  loop: start=0, step=1, limit=4
  $region2: #{run.1} parent=0 // loop_pre_header
    _
  $region3: #{run.1} parent=0 // loop_header
    %s8 = sphi 0, %s12
    %p9 = scmp.ge.s32.totalorder %s8, 4
    %s18 = sphi 0, %s20
    %s21 = sphi 0, %s18
    %s22 = sphi 0, %s21
    %s38 = sphi 0, %s22
    %s44 = sphi 0, %s46
    %s47 = sphi 0, %s44
    %s48 = sphi 0, %s47
    %s64 = sphi 0, %s48
    %s70 = sphi 0, %s72
    %s73 = sphi 0, %s70
    %s74 = sphi 0, %s73
    %s90 = sphi 0, %s74
  $region4: #{run.1} parent=0 // loop_header_branch
    %11 = sbr.rel (%p9) target = $region8
  $region5: #{run.1} parent=0 // loop_body
    %s13 = ssub.s32 %s8, 1
    %s14 = ssub.s32 %s8, 2
    %s15 = sadd.s32 %s8, 1
    %s16 = ssub.s32 %s8, %s15
    %p17 = scmp.eq.s32.totalorder %s16, 0
    %s19 = sadd.s32 %s18, 1
    %s20 = scalar_select %p17, %s18, %s19
    %p23 = pneg %p17
    %p24 = scmp.eq.s32.totalorder %s8, 1
    %p25 = por %p23, %p24
    %p26 = scmp.ne.s32.totalorder %s18, %s21
    %p27 = scmp.eq.s32.totalorder %s8, 0
    %p28 = por %p26, %p27
    %p29 = scmp.ne.s32.totalorder %s18, %s21
    %p30 = scmp.eq.s32.totalorder %s13, 1
    %p31 = por %p29, %p30
    %p32 = scmp.ne.s32.totalorder %s21, %s22
    %p33 = scmp.eq.s32.totalorder %s13, 0
    %p34 = por %p32, %p33
    %p35 = scmp.ne.s32.totalorder %s21, %s22
    %p36 = scmp.eq.s32.totalorder %s14, 1
    %p37 = por %p35, %p36
    %p39 = scmp.ne.s32.totalorder %s22, %s38
    %p40 = scmp.eq.s32.totalorder %s14, 0
    %p41 = por %p39, %p40
    %s42 = ssub.s32 %s8, %s15
    %p43 = scmp.eq.s32.totalorder %s42, 0
    %s45 = sadd.s32 %s44, 1
    %s46 = scalar_select %p43, %s44, %s45
    %p49 = pneg %p43
    %p50 = scmp.eq.s32.totalorder %s8, 1
    %p51 = por %p49, %p50
    %p52 = scmp.ne.s32.totalorder %s44, %s47
    %p53 = scmp.eq.s32.totalorder %s8, 0
    %p54 = por %p52, %p53
    %p55 = scmp.ne.s32.totalorder %s44, %s47
    %p56 = scmp.eq.s32.totalorder %s13, 1
    %p57 = por %p55, %p56
    %p58 = scmp.ne.s32.totalorder %s47, %s48
    %p59 = scmp.eq.s32.totalorder %s13, 0
    %p60 = por %p58, %p59
    %p61 = scmp.ne.s32.totalorder %s47, %s48
    %p62 = scmp.eq.s32.totalorder %s14, 1
    %p63 = por %p61, %p62
    %p65 = scmp.ne.s32.totalorder %s48, %s64
    %p66 = scmp.eq.s32.totalorder %s14, 0
    %p67 = por %p65, %p66
    %s68 = ssub.s32 %s8, %s15
    %p69 = scmp.eq.s32.totalorder %s68, 0
    %s71 = sadd.s32 %s70, 1
    %s72 = scalar_select %p69, %s70, %s71
    %p75 = pneg %p69
    %p76 = scmp.eq.s32.totalorder %s8, 1
    %p77 = por %p75, %p76
    %p78 = scmp.ne.s32.totalorder %s70, %s73
    %p79 = scmp.eq.s32.totalorder %s8, 0
    %p80 = por %p78, %p79
    %p81 = scmp.ne.s32.totalorder %s70, %s73
    %p82 = scmp.eq.s32.totalorder %s13, 1
    %p83 = por %p81, %p82
    %p84 = scmp.ne.s32.totalorder %s73, %s74
    %p85 = scmp.eq.s32.totalorder %s13, 0
    %p86 = por %p84, %p85
    %p87 = scmp.ne.s32.totalorder %s73, %s74
    %p88 = scmp.eq.s32.totalorder %s14, 1
    %p89 = por %p87, %p88
    %p91 = scmp.ne.s32.totalorder %s74, %s90
    %p92 = scmp.eq.s32.totalorder %s14, 0
    %p93 = por %p91, %p92
    %p94 = scmp.le.s32.totalorder 1, %s8
    %p95 = scmp.lt.s32.totalorder %s8, 3
    %p96 = pnand %p94, %p95
    %p97 = pneg %p96
    // Predicated region
    $region9: #{run.1} parent=5 // pred_check
      _
    $region10: #{run.1} parent=5 // pred_check_branch
      %99 = sbr.rel (%p96) target = $region12
    $region11: #{run.1} parent=5 // pred_region
      %s100 = ssub.s32 %s8, 1
    $region12: #{run.1} parent=5 // pred_fallthru
      _
    %p101 = scmp.lt.s32.totalorder %s8, 2
    // Predicated region
    $region13: #{run.1} parent=5 // pred_check
      %p102 = pneg %p101
    $region14: #{run.1} parent=5 // pred_check_branch
      %104 = sbr.rel (%p102) target = $region16
    $region15: #{run.1} parent=5 // pred_region
      // Predicated region
      $region17: #{run.1} parent=15 // pred_check
        %p105 = pneg %p28
      $region18: #{run.1} parent=15 // pred_check_branch
        %107 = sbr.rel (%p105) target = $region20
      $region19: #{run.1} parent=15 // pred_region
        %s108 = smul.u32 2, %s8
        %p109 = scmp.lt.s32.totalorder %s108, 3
        %s110 = scalar_select %p109, %s108, 3
        %s111 = smul.addr %s110, 8
        %s112 = scalar_lea.vmem %s0, %s111
        %s113 = smul.u32 2, %s8
      $region20: #{run.1} parent=15 // pred_fallthru
        _
      // Predicated region
      $region21: #{run.1} parent=15 // pred_check
        %p114 = pneg %p54
      $region22: #{run.1} parent=15 // pred_check_branch
        %116 = sbr.rel (%p114) target = $region24
      $region23: #{run.1} parent=15 // pred_region
        %s117 = smul.u32 2, %s8
        %p118 = scmp.lt.s32.totalorder %s117, 3
        %s119 = scalar_select %p118, %s117, 3
        %s120 = smul.addr %s119, 4
        %s121 = scalar_lea.vmem %s1, %s120
        %s122 = smul.u32 2, %s8
      $region24: #{run.1} parent=15 // pred_fallthru
        _
    $region16: #{run.1} parent=5 // pred_fallthru
      _
    %p123 = scmp.le.s32.totalorder 1, %s8
    %p124 = scmp.lt.s32.totalorder %s8, 3
    %p125 = pnand %p123, %p124
    %p126 = pneg %p125
    // Predicated region
    $region25: #{run.1} parent=5 // pred_check
      _
    $region26: #{run.1} parent=5 // pred_check_branch
      %128 = sbr.rel (%p125) target = $region28
    $region27: #{run.1} parent=5 // pred_region
      %s129 = ssub.s32 %s8, 1
      %s130 = smul.u32 2, %s13
      %p131 = scmp.lt.s32.totalorder %s130, 3
      %s132 = scalar_select %p131, %s130, 3
      %s133 = smul.addr %s132, 8
      %s134 = scalar_lea.vmem %s0, %s133
      %p135 = pneg %p34
      %p136 = pneg %p31
      %s137 = smul.u32 2, %s13
      %p138 = scmp.lt.s32.totalorder %s137, 3
      %s139 = scalar_select %p138, %s137, 3
      %s140 = smul.addr %s139, 4
      %s141 = scalar_lea.vmem %s1, %s140
      %p142 = pneg %p60
      %p143 = pneg %p57
      %p144 = pneg %p86
      %p145 = pneg %p83
      %p146 = scmp.lt.s32.totalorder %s13, 1
      %s147 = scalar_select %p146, %s13, 1
      %s148 = smul.addr %s147, 8
      %s149 = scalar_lea.vmem %s2, %s148
      %s150 = smul.u32 2, %s13
      %p151 = scmp.lt.s32.totalorder %s150, 3
      %s152 = scalar_select %p151, %s150, 3
      %s153 = smul.addr %s152, 8
      %s154 = scalar_lea.vmem %s0, %s153
      %s155 = smul.u32 2, %s13
      %s156 = smul.u32 2, %s13
      %p157 = scmp.lt.s32.totalorder %s156, 3
      %s158 = scalar_select %p157, %s156, 3
      %s159 = smul.addr %s158, 4
      %s160 = scalar_lea.vmem %s1, %s159
      %s161 = smul.u32 2, %s13
      %p162 = scmp.lt.s32.totalorder %s13, 1
      %s163 = scalar_select %p162, %s13, 1
      %s164 = smul.addr %s163, 8
      %s165 = scalar_lea.vmem %s2, %s164
      %v166 = vld [vmem:[%s154] sm:$0xff]
      %v167 = vld [vmem:[%s154 + $0x8] sm:$0xff]
      %v168 = vld [vmem:[%s160] sm:$0xf]
      %v169 = vld [vmem:[%s160 + $0x4] sm:$0xf]
      %v170 = vunpack.c.l.bf16 %v168
      %v171 = vunpack.c.l.bf16 %v169
      %v172 = vmul.f32 %v166, %v170
      %v173 = vmul.f32 %v167, %v171
      %v174 = vadd.f32 %v172, %v173
      %175 = vadd.xlane.f32.xlu0 %v174
      %v176 = vpop.xlane.xlu0 %175
      %v177 = vrot.slane %v176, 4
      %v178 = vadd.f32 %v176, %v177
      %v179 = vrot.slane %v178, 2
      %v180 = vadd.f32 %v178, %v179
      %v181 = vrot.slane %v180, 1
      %v182 = vadd.f32 %v180, %v181
      %s183 = vtos %v182
      %v184 = vstv %s183
      %185 = vst [vmem:[%s165] sm:$0xff] %v184
      %p186 = scmp.lt.s32.totalorder %s13, 1
      %s187 = scalar_select %p186, %s13, 1
      %s188 = smul.addr %s187, 8
      %s189 = scalar_lea.vmem %s2, %s188
      // Predicated region
      $region29: #{run.1} parent=27 // pred_check
        %p190 = pneg %p83
      $region30: #{run.1} parent=27 // pred_check_branch
        %192 = sbr.rel (%p190) target = $region32
      $region31: #{run.1} parent=27 // pred_region
        _
      $region32: #{run.1} parent=27 // pred_fallthru
        _
    $region28: #{run.1} parent=5 // pred_fallthru
      _
    %p193 = scmp.le.s32.totalorder 2, %s8
    // Predicated region
    $region33: #{run.1} parent=5 // pred_check
      %p194 = pneg %p193
    $region34: #{run.1} parent=5 // pred_check_branch
      %196 = sbr.rel (%p194) target = $region36
    $region35: #{run.1} parent=5 // pred_region
      %s197 = ssub.s32 %s8, 2
      // Predicated region
      $region37: #{run.1} parent=35 // pred_check
        %p198 = pneg %p89
      $region38: #{run.1} parent=35 // pred_check_branch
        %200 = sbr.rel (%p198) target = $region40
      $region39: #{run.1} parent=35 // pred_region
        %p201 = scmp.lt.s32.totalorder %s14, 1
        %s202 = scalar_select %p201, %s14, 1
        %s203 = smul.addr %s202, 8
        %s204 = scalar_lea.vmem %s2, %s203
      $region40: #{run.1} parent=35 // pred_fallthru
        _
    $region36: #{run.1} parent=5 // pred_fallthru
      _
  $region6: #{run.1} parent=0 // loop_footer
    %s12 = sadd.s32 1, %s8
  $region7: #{run.1} parent=0 // loop_footer_branch
    %7 = sbr.rel target = $region3
  $region8: #{run.1} parent=0 // loop_exit
    _

</llo_original>
